<compile_context>
chip_gen: v5e
topology: v5e:2x2
jax: 0.10.0
libtpu: 0.0.40
codegen_flags: <defaults>
</compile_context>

<pallas_src>
import functools

import jax
import jax.numpy as jnp
from jax.experimental import pallas as pl
from jax.experimental.pallas import tpu as pltpu


def _custom_loss_kernel(maskw_ref, y_ref, logits_ref, dsq_ref, out_ref,
                        num_acc, den_acc, *, batch, inv_macro_n):
    # maskw_ref:  [B*8, ts] f32  (x == 0) * weight[y]; 0 on padded tail
    # y_ref:      [B*8, ts] i32  class labels
    # logits_ref: [C, B*8, ts] f32 class-major logits (lane-dense, folded S)
    # dsq_ref:    [R, 128]  f32  (macro_targets - macro_outputs), zero padded, resident
    # out_ref:    [1, 1]    f32  final scalar loss
    # num_acc / den_acc: [B*8, 1] f32 scratch (per folded-row weighted-NLL num/den)
    C = logits_ref.shape[0]
    s = pl.program_id(0)
    n_s = pl.num_programs(0)

    @pl.when(s == 0)
    def _():
        num_acc[...] = jnp.zeros_like(num_acc)
        den_acc[...] = jnp.zeros_like(den_acc)

    mw = maskw_ref[...]                              # [B*8, ts]
    y = y_ref[...]                                   # [B*8, ts]

    # ---- stable log-softmax stats with the tiny static class dim unrolled ----
    m = logits_ref[0]
    for c in range(1, C):
        m = jnp.maximum(m, logits_ref[c])            # running max over classes

    sum_exp = jnp.zeros_like(m)
    logit_y = jnp.zeros_like(m)
    for c in range(C):
        lc = logits_ref[c]                           # [B*8, ts] class-c plane
        sum_exp = sum_exp + jnp.exp(lc - m)
        logit_y = jnp.where(y == c, lc, logit_y)     # gather logit at label

    nll = (m + jnp.log(sum_exp)) - logit_y           # [B*8, ts] -log p(y)

    num_acc[...] += jnp.sum(mw * nll, axis=-1, keepdims=True)   # [B*8, 1]
    den_acc[...] += jnp.sum(mw, axis=-1, keepdims=True)         # [B*8, 1]

    @pl.when(s == n_s - 1)
    def _():
        # Fold each batch's 8 sub-rows back together with static 8-row slices.
        # NOTE: if a batch row has no masked timesteps, den == 0 and the CE is
        # NaN/Inf — this matches the PyTorch reference (empty CrossEntropyLoss).
        ce = jnp.float32(0.0)
        for b in range(batch):
            nb = jnp.sum(num_acc[pl.ds(b * 8, 8), :])
            db = jnp.sum(den_acc[pl.ds(b * 8, 8), :])
            ce = ce + nb / db
        d = dsq_ref[...]
        mse = jnp.sum(d * d) * inv_macro_n           # /(M*B*D); pads are zero
        out_ref[...] = jnp.broadcast_to((ce * (1.0 / batch) + mse) * 0.5, (1, 1))


def custom_loss(micro_inputs, micro_outputs, micro_targets,
                macro_targets, macro_outputs, weight,
                alpha=0.5, block_lanes=4096):
    # `alpha` is accepted for API parity but (as in the PyTorch forward) unused.
    S, B, _T = micro_inputs.shape
    C = micro_outputs.shape[1]
    M, _, D = macro_targets.shape
    BF = B * 8                                       # sublane-folded row count

    assert block_lanes % 128 == 0, "block_lanes must be a multiple of 128"
    weight = jnp.asarray(weight, jnp.float32)

    # ---- tile selection (folded lane axis), clamped by an explicit VMEM budget ----
    L0 = pl.cdiv(S, 8)                               # folded lanes before tile rounding
    bytes_per_lane = (C + 2) * BF * 4                # logits + mask_w + y, per lane col
    vmem_budget = 40 << 20                           # for double-buffered input blocks
    max_ts = max(128, ((vmem_budget // 2) // bytes_per_lane) // 128 * 128)
    blk = min(block_lanes, max_ts)
    if L0 <= blk:
        ts = L = L0                                  # single block: full-extent lane dim
    else:
        ts = blk
        L = pl.cdiv(L0, ts) * ts
    S_pad = 8 * L
    pad = S_pad - S
    n_blocks = L // ts

    # ---- micro relayout: mask*weight[y] precomputed, everything folded to a
    # lane-dense [B*8, S_pad/8] layout via free row-major reshapes ----
    x_last = micro_inputs[:, :, -1]                                   # [S, B]
    mask_w = jnp.where(x_last == 0.0, weight[micro_targets], 0.0)     # [S, B]
    maskw_t = jnp.transpose(mask_w).astype(jnp.float32)               # [B, S]
    y_t = jnp.transpose(micro_targets).astype(jnp.int32)              # [B, S]
    # One transpose copy of the dominant tensor; ideally the producer would
    # emit class-major logits directly. Pad fuses with the transpose/reshape.
    logits = jnp.transpose(micro_outputs, (1, 2, 0)).astype(jnp.float32)  # [C, B, S]
    if pad:
        maskw_t = jnp.pad(maskw_t, ((0, 0), (0, pad)))   # pad 0 -> excluded from CE
        y_t = jnp.pad(y_t, ((0, 0), (0, pad)))
        logits = jnp.pad(logits, ((0, 0), (0, 0), (0, pad)))
    maskw_f = maskw_t.reshape(BF, L)                                  # [B*8, L]
    y_f = y_t.reshape(BF, L)                                          # [B*8, L]
    logits_f = logits.reshape(C, BF, L)                               # [C, B*8, L]

    # ---- macro relayout: (mt - mo) flattened, zero-padded to a dense
    # (rows % 8 == 0, 128) block; zeros contribute nothing to the MSE sum ----
    n_macro = M * B * D
    diff = (macro_targets.astype(jnp.float32)
            - macro_outputs.astype(jnp.float32)).reshape(-1)
    n_pad = pl.cdiv(n_macro, 1024) * 1024 - n_macro
    if n_pad:
        diff = jnp.pad(diff, (0, n_pad))
    dsq = diff.reshape(-1, 128)                                       # [R, 128]

    kernel = functools.partial(_custom_loss_kernel, batch=B,
                               inv_macro_n=1.0 / n_macro)

    # ---- VMEM accounting / compiler params ----
    in_block_bytes = 2 * bytes_per_lane * ts          # double-buffered input tiles
    resident_bytes = 2 * dsq.size * 4                 # resident dsq (x2 buffers)
    vmem_limit = int(min(max(in_block_bytes + resident_bytes + (4 << 20), 32 << 20),
                         64 << 20))

    flops = (10 * C + 12) * B * S + 2 * n_macro
    transcendentals = (C + 1) * B * S
    bytes_accessed = 4 * (maskw_f.size + y_f.size + logits_f.size + dsq.size + 1)

    out = pl.pallas_call(
        kernel,
        out_shape=jax.ShapeDtypeStruct((1, 1), jnp.float32),
        grid_spec=pltpu.PrefetchScalarGridSpec(
            num_scalar_prefetch=0,
            grid=(n_blocks,),
            in_specs=[
                pl.BlockSpec((BF, ts), lambda s: (0, s)),             # mask * weight[y]
                pl.BlockSpec((BF, ts), lambda s: (0, s)),             # labels
                pl.BlockSpec((C, BF, ts), lambda s: (0, 0, s)),       # logits (class-major)
                pl.BlockSpec(dsq.shape, lambda s: (0, 0)),            # macro diff (resident)
            ],
            out_specs=pl.BlockSpec((1, 1), lambda s: (0, 0)),
            scratch_shapes=[
                pltpu.VMEM((BF, 1), jnp.float32),   # per-row CE numerator
                pltpu.VMEM((BF, 1), jnp.float32),   # per-row CE denominator
            ],
        ),
        compiler_params=pltpu.CompilerParams(
            dimension_semantics=("arbitrary",),
            vmem_limit_bytes=vmem_limit,
        ),
        cost_estimate=pl.CostEstimate(
            flops=flops,
            transcendentals=transcendentals,
            bytes_accessed=bytes_accessed,
        ),
    )(maskw_f, y_f, logits_f, dsq)
    return out[0, 0]


def custom_loss_ref(micro_inputs, micro_outputs, micro_targets,
                    macro_targets, macro_outputs, weight):
    # Pure-JAX reference mirroring the PyTorch per-batch loop semantics.
    xi = micro_inputs[:, :, -1]                      # [S, B]
    B = xi.shape[1]
    ce_total = 0.0
    mse_total = 0.0
    for b in range(B):
        x = xi[:, b]
        y = micro_targets[:, b]
        y_hat = micro_outputs[:, :, b]               # [S, C]
        mask = (x == 0.0)
        logp = jax.nn.log_softmax(y_hat, axis=-1)
        nll = -jnp.take_along_axis(logp, y[:, None], axis=-1)[:, 0]
        w_y = weight[y]
        mf = mask.astype(jnp.float32)
        ce_total += jnp.sum(mf * w_y * nll) / jnp.sum(mf * w_y)
        diff = macro_targets[:, b, :] - macro_outputs[:, b, :]
        mse_total += jnp.mean(diff * diff)
    return (ce_total / B + mse_total / B) / 2.0


if __name__ == "__main__":
    # S is not a multiple of 8*128, so the small-tile call exercises both the
    # padded ragged tail and the multi-step reduction grid with accumulators;
    # the default call exercises the single-block (full-extent) path.
    S, B, T, C, M, D = 2000, 4, 3, 5, 2, 16

    key = jax.random.PRNGKey(0)
    k1, k2, k3, k4, k5, k6 = jax.random.split(key, 6)

    micro_inputs = jax.random.normal(k1, (S, B, T), dtype=jnp.float32)
    # Last feature contains exact zeros (the CE mask) — guarantee >=1 per batch.
    zero_mask = jax.random.bernoulli(k2, 0.5, (S, B))
    last_feat = jnp.where(zero_mask, 0.0,
                          jnp.abs(jax.random.normal(k3, (S, B))) + 1.0)
    last_feat = last_feat.at[0, :].set(0.0)
    micro_inputs = micro_inputs.at[:, :, -1].set(last_feat)

    micro_outputs = jax.random.normal(k4, (S, C, B), dtype=jnp.float32)
    micro_targets = jax.random.randint(k5, (S, B), 0, C, dtype=jnp.int32)
    macro_targets = jax.random.normal(k6, (M, B, D), dtype=jnp.float32)
    macro_outputs = jax.random.normal(jax.random.PRNGKey(1), (M, B, D),
                                      dtype=jnp.float32)
    # Deterministic class weights (module-level `weight` tensor in the PyTorch code).
    weight = jnp.linspace(0.5, 1.5, C, dtype=jnp.float32)

    ref = custom_loss_ref(micro_inputs, micro_outputs, micro_targets,
                          macro_targets, macro_outputs, weight)

    # Multi-block path (small tile -> padding + accumulator steps exercised).
    loss_multi = custom_loss(micro_inputs, micro_outputs, micro_targets,
                             macro_targets, macro_outputs, weight,
                             block_lanes=128)
    loss_multi = jax.block_until_ready(loss_multi)

    # Default large-tile (single block) path.
    loss_single = custom_loss(micro_inputs, micro_outputs, micro_targets,
                              macro_targets, macro_outputs, weight)
    loss_single = jax.block_until_ready(loss_single)

    assert jnp.allclose(loss_multi, ref, rtol=1e-5, atol=1e-5), (loss_multi, ref)
    assert jnp.allclose(loss_single, ref, rtol=1e-5, atol=1e-5), (loss_single, ref)

    print("KERNEL_OK")
</pallas_src>

<mosaic_0001>
module attributes {stable_mosaic.version = 11 : i64} {
  func.func @_custom_loss_kernel(%arg0: i32, %arg1: memref<32x128xf32, #tpu.memory_space<vmem>>, %arg2: memref<32x128xi32, #tpu.memory_space<vmem>>, %arg3: memref<5x32x128xf32, #tpu.memory_space<vmem>>, %arg4: memref<8x128xf32, #tpu.memory_space<vmem>>, %arg5: memref<1x1xf32, #tpu.memory_space<vmem>>, %arg6: memref<32x1xf32, #tpu.memory_space<vmem>>, %arg7: memref<32x1xf32, #tpu.memory_space<vmem>>) attributes {dimension_semantics = [#tpu.dimension_semantics<arbitrary>], iteration_bounds = array<i64: 2>, scalar_prefetch = 0 : i64, scratch_operands = 2 : i64, tpu.core_type = #tpu.core_type<tc>, window_params = [{transform_indices = @transform_0, window_bounds = array<i64: 32, 128>}, {transform_indices = @transform_1, window_bounds = array<i64: 32, 128>}, {transform_indices = @transform_2, window_bounds = array<i64: 5, 32, 128>}, {pipeline_mode = #tpu.pipeline_mode<synchronous>, transform_indices = @transform_3, window_bounds = array<i64: 8, 128>}, {pipeline_mode = #tpu.pipeline_mode<synchronous>, transform_indices = @transform_4, window_bounds = array<i64: 1, 1>}]} {
    %c0_i32 = arith.constant 0 : i32
    %0 = arith.cmpi eq, %arg0, %c0_i32 : i32
    %1 = arith.extui %0 : i1 to i32
    %c0_i32_0 = arith.constant 0 : i32
    %2 = arith.cmpi ne, %1, %c0_i32_0 : i32
    scf.if %2 {
      %cst_44 = arith.constant 0.000000e+00 : f32
      %78 = vector.broadcast %cst_44 : f32 to vector<32x1xf32>
      %c0_45 = arith.constant 0 : index
      %c0_46 = arith.constant 0 : index
      %79 = vector.load %arg6[%c0_45, %c0_46] : memref<32x1xf32, #tpu.memory_space<vmem>>, vector<32x1xf32>
      tpu.vector_store %arg6[%c0_45, %c0_46], %78 {strides = array<i32>} : memref<32x1xf32, #tpu.memory_space<vmem>>, vector<32x1xf32>,
      %cst_47 = arith.constant 0.000000e+00 : f32
      %80 = vector.broadcast %cst_47 : f32 to vector<32x1xf32>
      %c0_48 = arith.constant 0 : index
      %c0_49 = arith.constant 0 : index
      %81 = vector.load %arg7[%c0_48, %c0_49] : memref<32x1xf32, #tpu.memory_space<vmem>>, vector<32x1xf32>
      tpu.vector_store %arg7[%c0_48, %c0_49], %80 {strides = array<i32>} : memref<32x1xf32, #tpu.memory_space<vmem>>, vector<32x1xf32>,
    } else {
    }
    %c0 = arith.constant 0 : index
    %c0_1 = arith.constant 0 : index
    %3 = vector.load %arg1[%c0, %c0_1] : memref<32x128xf32, #tpu.memory_space<vmem>>, vector<32x128xf32>
    %c0_2 = arith.constant 0 : index
    %c0_3 = arith.constant 0 : index
    %4 = vector.load %arg2[%c0_2, %c0_3] : memref<32x128xi32, #tpu.memory_space<vmem>>, vector<32x128xi32>
    %c0_4 = arith.constant 0 : index
    %c0_5 = arith.constant 0 : index
    %c0_6 = arith.constant 0 : index
    %5 = vector.load %arg3[%c0_4, %c0_5, %c0_6] : memref<5x32x128xf32, #tpu.memory_space<vmem>>, vector<1x32x128xf32>
    %6 = vector.shape_cast %5 : vector<1x32x128xf32> to vector<32x128xf32>
    %c1 = arith.constant 1 : index
    %c0_7 = arith.constant 0 : index
    %c0_8 = arith.constant 0 : index
    %7 = vector.load %arg3[%c1, %c0_7, %c0_8] : memref<5x32x128xf32, #tpu.memory_space<vmem>>, vector<1x32x128xf32>
    %8 = vector.shape_cast %7 : vector<1x32x128xf32> to vector<32x128xf32>
    %9 = arith.maximumf %6, %8 : vector<32x128xf32>
    %c2 = arith.constant 2 : index
    %c0_9 = arith.constant 0 : index
    %c0_10 = arith.constant 0 : index
    %10 = vector.load %arg3[%c2, %c0_9, %c0_10] : memref<5x32x128xf32, #tpu.memory_space<vmem>>, vector<1x32x128xf32>
    %11 = vector.shape_cast %10 : vector<1x32x128xf32> to vector<32x128xf32>
    %12 = arith.maximumf %9, %11 : vector<32x128xf32>
    %c3 = arith.constant 3 : index
    %c0_11 = arith.constant 0 : index
    %c0_12 = arith.constant 0 : index
    %13 = vector.load %arg3[%c3, %c0_11, %c0_12] : memref<5x32x128xf32, #tpu.memory_space<vmem>>, vector<1x32x128xf32>
    %14 = vector.shape_cast %13 : vector<1x32x128xf32> to vector<32x128xf32>
    %15 = arith.maximumf %12, %14 : vector<32x128xf32>
    %c4 = arith.constant 4 : index
    %c0_13 = arith.constant 0 : index
    %c0_14 = arith.constant 0 : index
    %16 = vector.load %arg3[%c4, %c0_13, %c0_14] : memref<5x32x128xf32, #tpu.memory_space<vmem>>, vector<1x32x128xf32>
    %17 = vector.shape_cast %16 : vector<1x32x128xf32> to vector<32x128xf32>
    %18 = arith.maximumf %15, %17 : vector<32x128xf32>
    %cst = arith.constant 0.000000e+00 : f32
    %19 = vector.broadcast %cst : f32 to vector<32x128xf32>
    %cst_15 = arith.constant 0.000000e+00 : f32
    %20 = vector.broadcast %cst_15 : f32 to vector<32x128xf32>
    %c0_16 = arith.constant 0 : index
    %c0_17 = arith.constant 0 : index
    %c0_18 = arith.constant 0 : index
    %21 = vector.load %arg3[%c0_16, %c0_17, %c0_18] : memref<5x32x128xf32, #tpu.memory_space<vmem>>, vector<1x32x128xf32>
    %22 = vector.shape_cast %21 : vector<1x32x128xf32> to vector<32x128xf32>
    %23 = arith.subf %22, %18 : vector<32x128xf32>
    %24 = math.exp %23 : vector<32x128xf32>
    %25 = arith.addf %19, %24 : vector<32x128xf32>
    %c0_i32_19 = arith.constant 0 : i32
    %26 = vector.broadcast %c0_i32_19 : i32 to vector<32x128xi32>
    %27 = arith.cmpi eq, %4, %26 : vector<32x128xi32>
    %28 = arith.select %27, %22, %20 : vector<32x128xi1>, vector<32x128xf32>
    %c1_20 = arith.constant 1 : index
    %c0_21 = arith.constant 0 : index
    %c0_22 = arith.constant 0 : index
    %29 = vector.load %arg3[%c1_20, %c0_21, %c0_22] : memref<5x32x128xf32, #tpu.memory_space<vmem>>, vector<1x32x128xf32>
    %30 = vector.shape_cast %29 : vector<1x32x128xf32> to vector<32x128xf32>
    %31 = arith.subf %30, %18 : vector<32x128xf32>
    %32 = math.exp %31 : vector<32x128xf32>
    %33 = arith.addf %25, %32 : vector<32x128xf32>
    %c1_i32 = arith.constant 1 : i32
    %34 = vector.broadcast %c1_i32 : i32 to vector<32x128xi32>
    %35 = arith.cmpi eq, %4, %34 : vector<32x128xi32>
    %36 = arith.select %35, %30, %28 : vector<32x128xi1>, vector<32x128xf32>
    %c2_23 = arith.constant 2 : index
    %c0_24 = arith.constant 0 : index
    %c0_25 = arith.constant 0 : index
    %37 = vector.load %arg3[%c2_23, %c0_24, %c0_25] : memref<5x32x128xf32, #tpu.memory_space<vmem>>, vector<1x32x128xf32>
    %38 = vector.shape_cast %37 : vector<1x32x128xf32> to vector<32x128xf32>
    %39 = arith.subf %38, %18 : vector<32x128xf32>
    %40 = math.exp %39 : vector<32x128xf32>
    %41 = arith.addf %33, %40 : vector<32x128xf32>
    %c2_i32 = arith.constant 2 : i32
    %42 = vector.broadcast %c2_i32 : i32 to vector<32x128xi32>
    %43 = arith.cmpi eq, %4, %42 : vector<32x128xi32>
    %44 = arith.select %43, %38, %36 : vector<32x128xi1>, vector<32x128xf32>
    %c3_26 = arith.constant 3 : index
    %c0_27 = arith.constant 0 : index
    %c0_28 = arith.constant 0 : index
    %45 = vector.load %arg3[%c3_26, %c0_27, %c0_28] : memref<5x32x128xf32, #tpu.memory_space<vmem>>, vector<1x32x128xf32>
    %46 = vector.shape_cast %45 : vector<1x32x128xf32> to vector<32x128xf32>
    %47 = arith.subf %46, %18 : vector<32x128xf32>
    %48 = math.exp %47 : vector<32x128xf32>
    %49 = arith.addf %41, %48 : vector<32x128xf32>
    %c3_i32 = arith.constant 3 : i32
    %50 = vector.broadcast %c3_i32 : i32 to vector<32x128xi32>
    %51 = arith.cmpi eq, %4, %50 : vector<32x128xi32>
    %52 = arith.select %51, %46, %44 : vector<32x128xi1>, vector<32x128xf32>
    %c4_29 = arith.constant 4 : index
    %c0_30 = arith.constant 0 : index
    %c0_31 = arith.constant 0 : index
    %53 = vector.load %arg3[%c4_29, %c0_30, %c0_31] : memref<5x32x128xf32, #tpu.memory_space<vmem>>, vector<1x32x128xf32>
    %54 = vector.shape_cast %53 : vector<1x32x128xf32> to vector<32x128xf32>
    %55 = arith.subf %54, %18 : vector<32x128xf32>
    %56 = math.exp %55 : vector<32x128xf32>
    %57 = arith.addf %49, %56 : vector<32x128xf32>
    %c4_i32 = arith.constant 4 : i32
    %58 = vector.broadcast %c4_i32 : i32 to vector<32x128xi32>
    %59 = arith.cmpi eq, %4, %58 : vector<32x128xi32>
    %60 = arith.select %59, %54, %52 : vector<32x128xi1>, vector<32x128xf32>
    %61 = math.log %57 : vector<32x128xf32>
    %62 = arith.addf %18, %61 : vector<32x128xf32>
    %63 = arith.subf %62, %60 : vector<32x128xf32>
    %c0_32 = arith.constant 0 : index
    %c0_33 = arith.constant 0 : index
    %64 = vector.load %arg6[%c0_32, %c0_33] : memref<32x1xf32, #tpu.memory_space<vmem>>, vector<32x1xf32>
    %65 = arith.mulf %3, %63 : vector<32x128xf32>
    %cst_34 = arith.constant dense<0.000000e+00> : vector<32xf32>
    %66 = vector.multi_reduction <add>, %65, %cst_34 [1] : vector<32x128xf32> to vector<32xf32>
    %67 = vector.shape_cast %66 : vector<32xf32> to vector<32x1xf32>
    %68 = arith.addf %64, %67 : vector<32x1xf32>
    %c0_35 = arith.constant 0 : index
    %c0_36 = arith.constant 0 : index
    %69 = vector.load %arg6[%c0_35, %c0_36] : memref<32x1xf32, #tpu.memory_space<vmem>>, vector<32x1xf32>
    tpu.vector_store %arg6[%c0_35, %c0_36], %68 {strides = array<i32>} : memref<32x1xf32, #tpu.memory_space<vmem>>, vector<32x1xf32>,
    %c0_37 = arith.constant 0 : index
    %c0_38 = arith.constant 0 : index
    %70 = vector.load %arg7[%c0_37, %c0_38] : memref<32x1xf32, #tpu.memory_space<vmem>>, vector<32x1xf32>
    %cst_39 = arith.constant dense<0.000000e+00> : vector<32xf32>
    %71 = vector.multi_reduction <add>, %3, %cst_39 [1] : vector<32x128xf32> to vector<32xf32>
    %72 = vector.shape_cast %71 : vector<32xf32> to vector<32x1xf32>
    %73 = arith.addf %70, %72 : vector<32x1xf32>
    %c0_40 = arith.constant 0 : index
    %c0_41 = arith.constant 0 : index
    %74 = vector.load %arg7[%c0_40, %c0_41] : memref<32x1xf32, #tpu.memory_space<vmem>>, vector<32x1xf32>
    tpu.vector_store %arg7[%c0_40, %c0_41], %73 {strides = array<i32>} : memref<32x1xf32, #tpu.memory_space<vmem>>, vector<32x1xf32>,
    %c1_i32_42 = arith.constant 1 : i32
    %75 = arith.cmpi eq, %arg0, %c1_i32_42 : i32
    %76 = arith.extui %75 : i1 to i32
    %c0_i32_43 = arith.constant 0 : i32
    %77 = arith.cmpi ne, %76, %c0_i32_43 : i32
    scf.if %77 {
      %c0_44 = arith.constant 0 : index
      %c0_45 = arith.constant 0 : index
      %78 = vector.load %arg6[%c0_44, %c0_45] : memref<32x1xf32, #tpu.memory_space<vmem>>, vector<8x1xf32>
      %79 = vector.shape_cast %78 : vector<8x1xf32> to vector<1x8x1xf32>
      %cst_46 = arith.constant dense<0.000000e+00> : vector<1xf32>
      %80 = vector.multi_reduction <add>, %79, %cst_46 [1, 2] : vector<1x8x1xf32> to vector<1xf32>
      %81 = vector.shape_cast %80 : vector<1xf32> to vector<1x1x1xf32>
      %82 = vector.extract %81[0, 0, 0] : f32 from vector<1x1x1xf32>
      %c0_47 = arith.constant 0 : index
      %c0_48 = arith.constant 0 : index
      %83 = vector.load %arg7[%c0_47, %c0_48] : memref<32x1xf32, #tpu.memory_space<vmem>>, vector<8x1xf32>
      %84 = vector.shape_cast %83 : vector<8x1xf32> to vector<1x8x1xf32>
      %cst_49 = arith.constant dense<0.000000e+00> : vector<1xf32>
      %85 = vector.multi_reduction <add>, %84, %cst_49 [1, 2] : vector<1x8x1xf32> to vector<1xf32>
      %86 = vector.shape_cast %85 : vector<1xf32> to vector<1x1x1xf32>
      %87 = vector.extract %86[0, 0, 0] : f32 from vector<1x1x1xf32>
      %88 = arith.divf %82, %87 : f32
      %cst_50 = arith.constant 0.000000e+00 : f32
      %89 = arith.addf %cst_50, %88 : f32
      %c8 = arith.constant 8 : index
      %c0_51 = arith.constant 0 : index
      %90 = vector.load %arg6[%c8, %c0_51] : memref<32x1xf32, #tpu.memory_space<vmem>>, vector<8x1xf32>
      %91 = vector.shape_cast %90 : vector<8x1xf32> to vector<1x8x1xf32>
      %cst_52 = arith.constant dense<0.000000e+00> : vector<1xf32>
      %92 = vector.multi_reduction <add>, %91, %cst_52 [1, 2] : vector<1x8x1xf32> to vector<1xf32>
      %93 = vector.shape_cast %92 : vector<1xf32> to vector<1x1x1xf32>
      %94 = vector.extract %93[0, 0, 0] : f32 from vector<1x1x1xf32>
      %c8_53 = arith.constant 8 : index
      %c0_54 = arith.constant 0 : index
      %95 = vector.load %arg7[%c8_53, %c0_54] : memref<32x1xf32, #tpu.memory_space<vmem>>, vector<8x1xf32>
      %96 = vector.shape_cast %95 : vector<8x1xf32> to vector<1x8x1xf32>
      %cst_55 = arith.constant dense<0.000000e+00> : vector<1xf32>
      %97 = vector.multi_reduction <add>, %96, %cst_55 [1, 2] : vector<1x8x1xf32> to vector<1xf32>
      %98 = vector.shape_cast %97 : vector<1xf32> to vector<1x1x1xf32>
      %99 = vector.extract %98[0, 0, 0] : f32 from vector<1x1x1xf32>
      %100 = arith.divf %94, %99 : f32
      %101 = arith.addf %89, %100 : f32
      %c16 = arith.constant 16 : index
      %c0_56 = arith.constant 0 : index
      %102 = vector.load %arg6[%c16, %c0_56] : memref<32x1xf32, #tpu.memory_space<vmem>>, vector<8x1xf32>
      %103 = vector.shape_cast %102 : vector<8x1xf32> to vector<1x8x1xf32>
      %cst_57 = arith.constant dense<0.000000e+00> : vector<1xf32>
      %104 = vector.multi_reduction <add>, %103, %cst_57 [1, 2] : vector<1x8x1xf32> to vector<1xf32>
      %105 = vector.shape_cast %104 : vector<1xf32> to vector<1x1x1xf32>
      %106 = vector.extract %105[0, 0, 0] : f32 from vector<1x1x1xf32>
      %c16_58 = arith.constant 16 : index
      %c0_59 = arith.constant 0 : index
      %107 = vector.load %arg7[%c16_58, %c0_59] : memref<32x1xf32, #tpu.memory_space<vmem>>, vector<8x1xf32>
      %108 = vector.shape_cast %107 : vector<8x1xf32> to vector<1x8x1xf32>
      %cst_60 = arith.constant dense<0.000000e+00> : vector<1xf32>
      %109 = vector.multi_reduction <add>, %108, %cst_60 [1, 2] : vector<1x8x1xf32> to vector<1xf32>
      %110 = vector.shape_cast %109 : vector<1xf32> to vector<1x1x1xf32>
      %111 = vector.extract %110[0, 0, 0] : f32 from vector<1x1x1xf32>
      %112 = arith.divf %106, %111 : f32
      %113 = arith.addf %101, %112 : f32
      %c24 = arith.constant 24 : index
      %c0_61 = arith.constant 0 : index
      %114 = vector.load %arg6[%c24, %c0_61] : memref<32x1xf32, #tpu.memory_space<vmem>>, vector<8x1xf32>
      %115 = vector.shape_cast %114 : vector<8x1xf32> to vector<1x8x1xf32>
      %cst_62 = arith.constant dense<0.000000e+00> : vector<1xf32>
      %116 = vector.multi_reduction <add>, %115, %cst_62 [1, 2] : vector<1x8x1xf32> to vector<1xf32>
      %117 = vector.shape_cast %116 : vector<1xf32> to vector<1x1x1xf32>
      %118 = vector.extract %117[0, 0, 0] : f32 from vector<1x1x1xf32>
      %c24_63 = arith.constant 24 : index
      %c0_64 = arith.constant 0 : index
      %119 = vector.load %arg7[%c24_63, %c0_64] : memref<32x1xf32, #tpu.memory_space<vmem>>, vector<8x1xf32>
      %120 = vector.shape_cast %119 : vector<8x1xf32> to vector<1x8x1xf32>
      %cst_65 = arith.constant dense<0.000000e+00> : vector<1xf32>
      %121 = vector.multi_reduction <add>, %120, %cst_65 [1, 2] : vector<1x8x1xf32> to vector<1xf32>
      %122 = vector.shape_cast %121 : vector<1xf32> to vector<1x1x1xf32>
      %123 = vector.extract %122[0, 0, 0] : f32 from vector<1x1x1xf32>
      %124 = arith.divf %118, %123 : f32
      %125 = arith.addf %113, %124 : f32
      %c0_66 = arith.constant 0 : index
      %c0_67 = arith.constant 0 : index
      %126 = vector.load %arg4[%c0_66, %c0_67] : memref<8x128xf32, #tpu.memory_space<vmem>>, vector<8x128xf32>
      %127 = arith.mulf %126, %126 : vector<8x128xf32>
      %128 = vector.shape_cast %127 : vector<8x128xf32> to vector<1x8x128xf32>
      %cst_68 = arith.constant dense<0.000000e+00> : vector<1xf32>
      %129 = vector.multi_reduction <add>, %128, %cst_68 [1, 2] : vector<1x8x128xf32> to vector<1xf32>
      %130 = vector.shape_cast %129 : vector<1xf32> to vector<1x1x1xf32>
      %131 = vector.extract %130[0, 0, 0] : f32 from vector<1x1x1xf32>
      %cst_69 = arith.constant 7.812500e-03 : f32
      %132 = arith.mulf %131, %cst_69 : f32
      %cst_70 = arith.constant 2.500000e-01 : f32
      %133 = arith.mulf %125, %cst_70 : f32
      %134 = arith.addf %133, %132 : f32
      %cst_71 = arith.constant 5.000000e-01 : f32
      %135 = arith.mulf %134, %cst_71 : f32
      %136 = vector.broadcast %135 : f32 to vector<1x1xf32>
      %c0_72 = arith.constant 0 : index
      %c0_73 = arith.constant 0 : index
      %137 = vector.load %arg5[%c0_72, %c0_73] : memref<1x1xf32, #tpu.memory_space<vmem>>, vector<1x1xf32>
      tpu.vector_store %arg5[%c0_72, %c0_73], %136 {strides = array<i32>} : memref<1x1xf32, #tpu.memory_space<vmem>>, vector<1x1xf32>,
    } else {
    }
    return
  }
  func.func @transform_0(%arg0: i32) -> (i32, i32) {
    %c0_i32 = arith.constant 0 : i32
    %c0_i32_0 = arith.constant 0 : i32
    return %c0_i32, %arg0 : i32, i32
  }
  func.func @transform_1(%arg0: i32) -> (i32, i32) {
    %c0_i32 = arith.constant 0 : i32
    %c0_i32_0 = arith.constant 0 : i32
    return %c0_i32, %arg0 : i32, i32
  }
  func.func @transform_2(%arg0: i32) -> (i32, i32, i32) {
    %c0_i32 = arith.constant 0 : i32
    %c0_i32_0 = arith.constant 0 : i32
    %c0_i32_1 = arith.constant 0 : i32
    return %c0_i32, %c0_i32_0, %arg0 : i32, i32, i32
  }
  func.func @transform_3(%arg0: i32) -> (i32, i32) {
    %c0_i32 = arith.constant 0 : i32
    %c0_i32_0 = arith.constant 0 : i32
    %c0_i32_1 = arith.constant 0 : i32
    return %c0_i32, %c0_i32_0 : i32, i32
  }
  func.func @transform_4(%arg0: i32) -> (i32, i32) {
    %c0_i32 = arith.constant 0 : i32
    %c0_i32_0 = arith.constant 0 : i32
    %c0_i32_1 = arith.constant 0 : i32
    return %c0_i32, %c0_i32_0 : i32, i32
  }
}

</mosaic_0001>

<llo_original>
// kernel: tpu_custom_call.1
$region0: #{tpu_custom_call.1}
  #allocation0 [shape = 'u32[]', space=smem, size = 0x4, offset = 0x4, fixed_abs, tag = 'smem constant byte address 0x4 - core index']
  #allocation1 [shape = 'u32[72,128]{1,0:T(1,128)}', space=vmem, size = 0x9000, scoped, tag = 'internal scratch']
  #allocation2 [shape = 'f32[32,1]{1,0:T(8,128)}', space=vmem, size = 0x4000, scoped, tag = 'scratch operand']
  #allocation3 [shape = 'f32[32,1]{1,0:T(8,128)}', space=vmem, size = 0x4000, scoped, tag = 'scratch operand']
  %s0 = inlined_call_operand.hbm [shape: f32[32,256], index: 0, kind: input, shape index: {}]
  %s1 = inlined_call_operand.hbm [shape: s32[32,256], index: 1, kind: input, shape index: {}]
  %s2 = inlined_call_operand.hbm [shape: f32[5,32,256], index: 2, kind: input, shape index: {}]
  %s3 = inlined_call_operand.hbm [shape: f32[8,128], index: 3, kind: input, shape index: {}]
  %s4 = inlined_call_operand.hbm [shape: f32[1,1], index: 4, kind: output, shape index: {}]
  %s5 = sld [smem:[#allocation0]]
  $region73: #{tpu_custom_call.1} parent=0
    _
  %s7 = ssub.s32 1, %s5
  %s8 = scalar_select 0, %s7, %s5
  $region1: #{tpu_custom_call.1} parent=0
    #allocation4 [shape = 'u8[32768]{0}', space=vmem, size = 0x8000, scoped, tag = 'input window, operand 0']
    #allocation5 [shape = 's32[2]{0}', space=sflag, size = 0x8, scoped, tag = 'scoped memory for tpu_custom_call.1']
    #allocation6 [shape = 's32[2]{0}', space=sflag, size = 0x8, scoped, tag = 'scoped memory for tpu_custom_call.1']
    #allocation7 [shape = 'u8[32768]{0}', space=vmem, size = 0x8000, scoped, tag = 'input window, operand 1']
    #allocation8 [shape = 's32[2]{0}', space=sflag, size = 0x8, scoped, tag = 'scoped memory for tpu_custom_call.1']
    #allocation9 [shape = 'u8[163840]{0}', space=vmem, size = 0x28000, scoped, tag = 'input window, operand 2']
    #allocation10 [shape = 'u8[4096]{0}', space=vmem, size = 0x1000, scoped, tag = 'input window, operand 3, single buffered']
    #allocation11 [shape = 's32[1]{0}', space=sflag, size = 0x4, scoped, tag = 'scoped memory for tpu_custom_call.1']
    #allocation12 [shape = 'u8[512]{0}', space=vmem, size = 0x400, scoped, tag = 'output window, operand 0, single buffered']
    %9 = vsyncpa [#allocation5], 0
    %s10 = scalar_lea.sflag [#allocation5], 1
    %11 = vsyncpa %s10, 0
    %12 = vsyncpa [#allocation8], 0
    %s13 = scalar_lea.sflag [#allocation8], 1
    %14 = vsyncpa %s13, 0
    %15 = vsyncpa [#allocation11], 0
    %16 = vsyncpa [#allocation6], 0
    loop: start=0, step=1, limit=4
    $region2: #{tpu_custom_call.1} parent=1 // loop_pre_header
      _
    $region3: #{tpu_custom_call.1} parent=1 // loop_header
      %s18 = sphi 0, %s22
      %p19 = scmp.ge.s32.totalorder %s18, 4
      %s28 = sphi 0, %s30
      %s31 = sphi 0, %s28
      %s32 = sphi 0, %s31
      %s48 = sphi 0, %s32
      %s54 = sphi 0, %s56
      %s57 = sphi 0, %s54
      %s58 = sphi 0, %s57
      %s74 = sphi 0, %s58
      %s80 = sphi 0, %s82
      %s83 = sphi 0, %s80
      %s84 = sphi 0, %s83
      %s100 = sphi 0, %s84
      %s104 = sphi 0, %s104
      %s106 = sphi 0, %s104
      %s107 = sphi 0, %s106
      %s121 = sphi 0, %s107
      %s125 = sphi 0, %s125
      %s127 = sphi 0, %s125
      %s128 = sphi 0, %s127
      %s142 = sphi 0, %s128
    $region4: #{tpu_custom_call.1} parent=1 // loop_header_branch
      %21 = sbr.rel (%p19) target = $region8
    $region5: #{tpu_custom_call.1} parent=1 // loop_body
      %s23 = ssub.s32 %s18, 1
      %s24 = ssub.s32 %s18, 2
      %s25 = sadd.s32 %s18, 1
      %s26 = ssub.s32 %s18, %s25
      %p27 = scmp.eq.s32.totalorder %s26, 0
      %s29 = sadd.s32 %s28, 1
      %s30 = scalar_select %p27, %s28, %s29
      %p33 = pneg %p27
      %p34 = scmp.eq.s32.totalorder %s18, 1
      %p35 = por %p33, %p34
      %p36 = scmp.ne.s32.totalorder %s28, %s31
      %p37 = scmp.eq.s32.totalorder %s18, 0
      %p38 = por %p36, %p37
      %p39 = scmp.ne.s32.totalorder %s28, %s31
      %p40 = scmp.eq.s32.totalorder %s23, 1
      %p41 = por %p39, %p40
      %p42 = scmp.ne.s32.totalorder %s31, %s32
      %p43 = scmp.eq.s32.totalorder %s23, 0
      %p44 = por %p42, %p43
      %p45 = scmp.ne.s32.totalorder %s31, %s32
      %p46 = scmp.eq.s32.totalorder %s24, 1
      %p47 = por %p45, %p46
      %p49 = scmp.ne.s32.totalorder %s32, %s48
      %p50 = scmp.eq.s32.totalorder %s24, 0
      %p51 = por %p49, %p50
      %s52 = ssub.s32 %s18, %s25
      %p53 = scmp.eq.s32.totalorder %s52, 0
      %s55 = sadd.s32 %s54, 1
      %s56 = scalar_select %p53, %s54, %s55
      %p59 = pneg %p53
      %p60 = scmp.eq.s32.totalorder %s18, 1
      %p61 = por %p59, %p60
      %p62 = scmp.ne.s32.totalorder %s54, %s57
      %p63 = scmp.eq.s32.totalorder %s18, 0
      %p64 = por %p62, %p63
      %p65 = scmp.ne.s32.totalorder %s54, %s57
      %p66 = scmp.eq.s32.totalorder %s23, 1
      %p67 = por %p65, %p66
      %p68 = scmp.ne.s32.totalorder %s57, %s58
      %p69 = scmp.eq.s32.totalorder %s23, 0
      %p70 = por %p68, %p69
      %p71 = scmp.ne.s32.totalorder %s57, %s58
      %p72 = scmp.eq.s32.totalorder %s24, 1
      %p73 = por %p71, %p72
      %p75 = scmp.ne.s32.totalorder %s58, %s74
      %p76 = scmp.eq.s32.totalorder %s24, 0
      %p77 = por %p75, %p76
      %s78 = ssub.s32 %s18, %s25
      %p79 = scmp.eq.s32.totalorder %s78, 0
      %s81 = sadd.s32 %s80, 1
      %s82 = scalar_select %p79, %s80, %s81
      %p85 = pneg %p79
      %p86 = scmp.eq.s32.totalorder %s18, 1
      %p87 = por %p85, %p86
      %p88 = scmp.ne.s32.totalorder %s80, %s83
      %p89 = scmp.eq.s32.totalorder %s18, 0
      %p90 = por %p88, %p89
      %p91 = scmp.ne.s32.totalorder %s80, %s83
      %p92 = scmp.eq.s32.totalorder %s23, 1
      %p93 = por %p91, %p92
      %p94 = scmp.ne.s32.totalorder %s83, %s84
      %p95 = scmp.eq.s32.totalorder %s23, 0
      %p96 = por %p94, %p95
      %p97 = scmp.ne.s32.totalorder %s83, %s84
      %p98 = scmp.eq.s32.totalorder %s24, 1
      %p99 = por %p97, %p98
      %p101 = scmp.ne.s32.totalorder %s84, %s100
      %p102 = scmp.eq.s32.totalorder %s24, 0
      %p103 = por %p101, %p102
      %s105 = sadd.s32 %s104, 1
      %p108 = scmp.eq.s32.totalorder %s18, 1
      %p109 = scmp.ne.s32.totalorder %s104, %s106
      %p110 = scmp.eq.s32.totalorder %s18, 0
      %p111 = por %p109, %p110
      %p112 = scmp.ne.s32.totalorder %s104, %s106
      %p113 = scmp.eq.s32.totalorder %s23, 1
      %p114 = por %p112, %p113
      %p115 = scmp.ne.s32.totalorder %s106, %s107
      %p116 = scmp.eq.s32.totalorder %s23, 0
      %p117 = por %p115, %p116
      %p118 = scmp.ne.s32.totalorder %s106, %s107
      %p119 = scmp.eq.s32.totalorder %s24, 1
      %p120 = por %p118, %p119
      %p122 = scmp.ne.s32.totalorder %s107, %s121
      %p123 = scmp.eq.s32.totalorder %s24, 0
      %p124 = por %p122, %p123
      %s126 = sadd.s32 %s125, 1
      %p129 = scmp.eq.s32.totalorder %s18, 1
      %p130 = scmp.ne.s32.totalorder %s125, %s127
      %p131 = scmp.eq.s32.totalorder %s18, 0
      %p132 = por %p130, %p131
      %p133 = scmp.ne.s32.totalorder %s125, %s127
      %p134 = scmp.eq.s32.totalorder %s23, 1
      %p135 = por %p133, %p134
      %p136 = scmp.ne.s32.totalorder %s127, %s128
      %p137 = scmp.eq.s32.totalorder %s23, 0
      %p138 = por %p136, %p137
      %p139 = scmp.ne.s32.totalorder %s127, %s128
      %p140 = scmp.eq.s32.totalorder %s24, 1
      %p141 = por %p139, %p140
      %p143 = scmp.ne.s32.totalorder %s128, %s142
      %p144 = scmp.eq.s32.totalorder %s24, 0
      %p145 = por %p143, %p144
      %p146 = scmp.le.s32.totalorder 1, %s18
      %p147 = scmp.lt.s32.totalorder %s18, 3
      %p148 = pnand %p146, %p147
      %p149 = pneg %p148
      // Predicated region
      $region9: #{tpu_custom_call.1} parent=5 // pred_check
        _
      $region10: #{tpu_custom_call.1} parent=5 // pred_check_branch
        %151 = sbr.rel (%p148) target = $region12
      $region11: #{tpu_custom_call.1} parent=5 // pred_region
        %s152 = ssub.s32 %s18, 1
        // Predicated region
        $region13: #{tpu_custom_call.1} parent=11 // pred_check
          %p153 = pneg %p117
        $region14: #{tpu_custom_call.1} parent=11 // pred_check_branch
          %155 = sbr.rel (%p153) target = $region16
        $region15: #{tpu_custom_call.1} parent=11 // pred_region
          %157 = vsyncadd [#allocation11], 0
          %s159 = sshll.u32 %s3, 4
          %s160 = int_to_ptr.hbm [resolvable:$true] %s159
          %s161 = sshll.u32 [#allocation10], 4
          %s162 = int_to_ptr.vmem [resolvable:$true] %s161
          %164 = dma.hbm_to_vmem [thread:$0]  %s160, 128, %s162, [#allocation11]
        $region16: #{tpu_custom_call.1} parent=11 // pred_fallthru
          _
      $region12: #{tpu_custom_call.1} parent=5 // pred_fallthru
        _
      %p165 = scmp.lt.s32.totalorder %s18, 2
      // Predicated region
      $region17: #{tpu_custom_call.1} parent=5 // pred_check
        %p166 = pneg %p165
      $region18: #{tpu_custom_call.1} parent=5 // pred_check_branch
        %168 = sbr.rel (%p166) target = $region20
      $region19: #{tpu_custom_call.1} parent=5 // pred_region
        // Predicated region
        $region21: #{tpu_custom_call.1} parent=19 // pred_check
          %p169 = pneg %p38
        $region22: #{tpu_custom_call.1} parent=19 // pred_check_branch
          %171 = sbr.rel (%p169) target = $region24
        $region23: #{tpu_custom_call.1} parent=19 // pred_region
          %s172 = sand.u32 %s28, 1
          %s173 = scalar_lea.sflag [#allocation5], %s172
          %s174 = sand.u32 %s28, 1
          %s175 = smul.addr %s174, 32
          %s176 = scalar_lea.vmem [#allocation4], %s175
          %178 = vsyncadd %s173, 0
          %s179 = smul.addr %s18, 8
          %s180 = scalar_lea.hbm %s0, %s179
          %s181 = sshll.u32 %s180, 4
          %s182 = int_to_ptr.hbm [resolvable:$true] %s181
          %s183 = sshll.u32 %s176, 4
          %s184 = int_to_ptr.vmem [resolvable:$true] %s183
          %189 = dma.hbm_to_vmem [thread:$0]  %s182, 512, %s184, %s173, 256, 128, 8
        $region24: #{tpu_custom_call.1} parent=19 // pred_fallthru
          _
        // Predicated region
        $region25: #{tpu_custom_call.1} parent=19 // pred_check
          %p190 = pneg %p64
        $region26: #{tpu_custom_call.1} parent=19 // pred_check_branch
          %192 = sbr.rel (%p190) target = $region28
        $region27: #{tpu_custom_call.1} parent=19 // pred_region
          %s193 = sand.u32 %s18, 1
          %s194 = scalar_lea.sflag [#allocation8], %s193
          %s195 = sand.u32 %s54, 1
          %s196 = smul.addr %s195, 32
          %s197 = scalar_lea.vmem [#allocation7], %s196
          %199 = vsyncadd %s194, 0
          %s200 = smul.addr %s18, 8
          %s201 = scalar_lea.hbm %s1, %s200
          %s202 = sshll.u32 %s201, 4
          %s203 = int_to_ptr.hbm [resolvable:$true] %s202
          %s204 = sshll.u32 %s197, 4
          %s205 = int_to_ptr.vmem [resolvable:$true] %s204
          %210 = dma.hbm_to_vmem [thread:$0]  %s203, 512, %s205, %s194, 256, 128, 8
        $region28: #{tpu_custom_call.1} parent=19 // pred_fallthru
          _
        // Predicated region
        $region29: #{tpu_custom_call.1} parent=19 // pred_check
          %p211 = pneg %p90
        $region30: #{tpu_custom_call.1} parent=19 // pred_check_branch
          %213 = sbr.rel (%p211) target = $region32
        $region31: #{tpu_custom_call.1} parent=19 // pred_region
          %s214 = sand.u32 %s18, 1
          %s215 = scalar_lea.sflag [#allocation8], %s214
          %s216 = sand.u32 %s80, 1
          %s217 = smul.addr %s216, 160
          %s218 = scalar_lea.vmem [#allocation9], %s217
          %220 = vsyncadd %s215, 0
          %s221 = smul.addr %s18, 8
          %s222 = scalar_lea.hbm %s2, %s221
          %s223 = sshll.u32 %s222, 4
          %s224 = int_to_ptr.hbm [resolvable:$true] %s223
          %s225 = sshll.u32 %s218, 4
          %s226 = int_to_ptr.vmem [resolvable:$true] %s225
          %231 = dma.hbm_to_vmem [thread:$0]  %s224, 2560, %s226, %s215, 256, 128, 8
        $region32: #{tpu_custom_call.1} parent=19 // pred_fallthru
          _
      $region20: #{tpu_custom_call.1} parent=5 // pred_fallthru
        _
      %p232 = scmp.le.s32.totalorder 1, %s18
      %p233 = scmp.lt.s32.totalorder %s18, 3
      %p234 = pnand %p232, %p233
      %p235 = pneg %p234
      // Predicated region
      $region33: #{tpu_custom_call.1} parent=5 // pred_check
        _
      $region34: #{tpu_custom_call.1} parent=5 // pred_check_branch
        %237 = sbr.rel (%p234) target = $region36
      $region35: #{tpu_custom_call.1} parent=5 // pred_region
        %s238 = ssub.s32 %s18, 1
        %s239 = sand.u32 %s31, 1
        %s240 = scalar_lea.sflag [#allocation5], %s239
        %s241 = sand.u32 %s31, 1
        %s242 = smul.addr %s241, 32
        %s243 = scalar_lea.vmem [#allocation4], %s242
        // Predicated region
        $region37: #{tpu_custom_call.1} parent=35 // pred_check
          %p244 = pneg %p44
        $region38: #{tpu_custom_call.1} parent=35 // pred_check_branch
          %246 = sbr.rel (%p244) target = $region40
        $region39: #{tpu_custom_call.1} parent=35 // pred_region
          %248 = dma.done %s240, 512
        $region40: #{tpu_custom_call.1} parent=35 // pred_fallthru
          _
        %s249 = sand.u32 %s23, 1
        %s250 = scalar_lea.sflag [#allocation8], %s249
        %s251 = sand.u32 %s57, 1
        %s252 = smul.addr %s251, 32
        %s253 = scalar_lea.vmem [#allocation7], %s252
        // Predicated region
        $region41: #{tpu_custom_call.1} parent=35 // pred_check
          %p254 = pneg %p70
        $region42: #{tpu_custom_call.1} parent=35 // pred_check_branch
          %256 = sbr.rel (%p254) target = $region44
        $region43: #{tpu_custom_call.1} parent=35 // pred_region
          %258 = dma.done %s250, 512
        $region44: #{tpu_custom_call.1} parent=35 // pred_fallthru
          _
        %s259 = sand.u32 %s23, 1
        %s260 = scalar_lea.sflag [#allocation8], %s259
        %s261 = sand.u32 %s83, 1
        %s262 = smul.addr %s261, 160
        %s263 = scalar_lea.vmem [#allocation9], %s262
        // Predicated region
        $region45: #{tpu_custom_call.1} parent=35 // pred_check
          %p264 = pneg %p96
        $region46: #{tpu_custom_call.1} parent=35 // pred_check_branch
          %266 = sbr.rel (%p264) target = $region48
        $region47: #{tpu_custom_call.1} parent=35 // pred_region
          %268 = dma.done %s260, 2560
        $region48: #{tpu_custom_call.1} parent=35 // pred_fallthru
          _
        // Predicated region
        $region49: #{tpu_custom_call.1} parent=35 // pred_check
          %p269 = pneg %p117
        $region50: #{tpu_custom_call.1} parent=35 // pred_check_branch
          %271 = sbr.rel (%p269) target = $region52
        $region51: #{tpu_custom_call.1} parent=35 // pred_region
          %273 = dma.done [#allocation11], 128
        $region52: #{tpu_custom_call.1} parent=35 // pred_fallthru
          _
        %s274 = sand.u32 %s31, 1
        %s275 = scalar_lea.sflag [#allocation5], %s274
        %s276 = sand.u32 %s31, 1
        %s277 = smul.addr %s276, 32
        %s278 = scalar_lea.vmem [#allocation4], %s277
        %p279 = pneg %p44
        %p280 = pneg %p41
        %s281 = sand.u32 %s23, 1
        %s282 = scalar_lea.sflag [#allocation8], %s281
        %s283 = sand.u32 %s57, 1
        %s284 = smul.addr %s283, 32
        %s285 = scalar_lea.vmem [#allocation7], %s284
        %p286 = pneg %p70
        %p287 = pneg %p67
        %s288 = sand.u32 %s23, 1
        %s289 = scalar_lea.sflag [#allocation8], %s288
        %s290 = sand.u32 %s83, 1
        %s291 = smul.addr %s290, 160
        %s292 = scalar_lea.vmem [#allocation9], %s291
        %p293 = pneg %p96
        %p294 = pneg %p93
        %p295 = pneg %p117
        %p296 = pneg %p114
        %p297 = pneg %p138
        %p298 = pneg %p135
        %p299 = scmp.eq.s32.totalorder %s23, 0
        // Predicated region
        $region53: #{tpu_custom_call.1} parent=35 // pred_check
          %p300 = pneg %p299
        $region54: #{tpu_custom_call.1} parent=35 // pred_check_branch
          %302 = sbr.rel (%p300) target = $region56
        $region55: #{tpu_custom_call.1} parent=35 // pred_region
          %vm303 = vcmask 7168
          %304 = vst.msk [vmem:[#allocation2] sm:$0xff] %vm303, 0.0
          %305 = vst.msk [vmem:[#allocation2 + $0x8] sm:$0xff] %vm303, 0.0
          %306 = vst.msk [vmem:[#allocation2 + $0x10] sm:$0xff] %vm303, 0.0
          %307 = vst.msk [vmem:[#allocation2 + $0x18] sm:$0xff] %vm303, 0.0
          %308 = vst.msk [vmem:[#allocation3] sm:$0xff] %vm303, 0.0
          %309 = vst.msk [vmem:[#allocation3 + $0x8] sm:$0xff] %vm303, 0.0
          %310 = vst.msk [vmem:[#allocation3 + $0x10] sm:$0xff] %vm303, 0.0
          %311 = vst.msk [vmem:[#allocation3 + $0x18] sm:$0xff] %vm303, 0.0
        $region56: #{tpu_custom_call.1} parent=35 // pred_fallthru
          _
        %v312 = vld [vmem:[%s243] sm:$0xff]
        %v313 = vld [vmem:[%s243 + $0x8] sm:$0xff]
        %v314 = vld [vmem:[%s243 + $0x10] sm:$0xff]
        %v315 = vld [vmem:[%s243 + $0x18] sm:$0xff]
        %v316 = vld [vmem:[%s253] sm:$0xff]
        %v317 = vld [vmem:[%s253 + $0x8] sm:$0xff]
        %v318 = vld [vmem:[%s253 + $0x10] sm:$0xff]
        %v319 = vld [vmem:[%s253 + $0x18] sm:$0xff]
        %v320 = vld [vmem:[%s263] sm:$0xff]
        %v321 = vld [vmem:[%s263 + $0x8] sm:$0xff]
        %v322 = vld [vmem:[%s263 + $0x10] sm:$0xff]
        %v323 = vld [vmem:[%s263 + $0x18] sm:$0xff]
        %s324 = scalar_lea.vmem %s263, 32 [#allocation9]
        %v325 = vld [vmem:[%s324] sm:$0xff]
        %v326 = vld [vmem:[%s324 + $0x8] sm:$0xff]
        %v327 = vld [vmem:[%s324 + $0x10] sm:$0xff]
        %v328 = vld [vmem:[%s324 + $0x18] sm:$0xff]
        %v329 = vmax.f32 %v320, %v325
        %v330 = vmax.f32 %v321, %v326
        %v331 = vmax.f32 %v322, %v327
        %v332 = vmax.f32 %v323, %v328
        %s333 = scalar_lea.vmem %s263, 64 [#allocation9]
        %v334 = vld [vmem:[%s333] sm:$0xff]
        %v335 = vld [vmem:[%s333 + $0x8] sm:$0xff]
        %v336 = vld [vmem:[%s333 + $0x10] sm:$0xff]
        %v337 = vld [vmem:[%s333 + $0x18] sm:$0xff]
        %v338 = vmax.f32 %v329, %v334
        %v339 = vmax.f32 %v330, %v335
        %v340 = vmax.f32 %v331, %v336
        %v341 = vmax.f32 %v332, %v337
        %s342 = scalar_lea.vmem %s263, 96 [#allocation9]
        %v343 = vld [vmem:[%s342] sm:$0xff]
        %v344 = vld [vmem:[%s342 + $0x8] sm:$0xff]
        %v345 = vld [vmem:[%s342 + $0x10] sm:$0xff]
        %v346 = vld [vmem:[%s342 + $0x18] sm:$0xff]
        %v347 = vmax.f32 %v338, %v343
        %v348 = vmax.f32 %v339, %v344
        %v349 = vmax.f32 %v340, %v345
        %v350 = vmax.f32 %v341, %v346
        %s351 = scalar_lea.vmem %s263, 128 [#allocation9]
        %v352 = vld [vmem:[%s351] sm:$0xff]
        %v353 = vld [vmem:[%s351 + $0x8] sm:$0xff]
        %v354 = vld [vmem:[%s351 + $0x10] sm:$0xff]
        %v355 = vld [vmem:[%s351 + $0x18] sm:$0xff]
        %v356 = vmax.f32 %v347, %v352
        %v357 = vmax.f32 %v348, %v353
        %v358 = vmax.f32 %v349, %v354
        %v359 = vmax.f32 %v350, %v355
        %v360 = vsub.f32 %v320, %v356
        %v361 = vsub.f32 %v321, %v357
        %v362 = vsub.f32 %v322, %v358
        %v363 = vsub.f32 %v323, %v359
        %v364 = vmul.f32 %v360, 1.442695
        %v365 = vpow.pop %v364
        %v366 = vmul.f32 %v361, 1.442695
        %v367 = vpow.pop %v366
        %v368 = vmul.f32 %v362, 1.442695
        %v369 = vpow.pop %v368
        %v370 = vmul.f32 %v363, 1.442695
        %v371 = vpow.pop %v370
        %v372 = vadd.f32 %v365, 0.0
        %v373 = vadd.f32 %v367, 0.0
        %v374 = vadd.f32 %v369, 0.0
        %v375 = vadd.f32 %v371, 0.0
        %vm376 = vcmp.eq.s32.totalorder %v316, 0
        %vm377 = vcmp.eq.s32.totalorder %v317, 0
        %vm378 = vcmp.eq.s32.totalorder %v318, 0
        %vm379 = vcmp.eq.s32.totalorder %v319, 0
        %v380 = vsel %vm376, %v320, 0.0
        %v381 = vsel %vm377, %v321, 0.0
        %v382 = vsel %vm378, %v322, 0.0
        %v383 = vsel %vm379, %v323, 0.0
        %v384 = vsub.f32 %v325, %v356
        %v385 = vsub.f32 %v326, %v357
        %v386 = vsub.f32 %v327, %v358
        %v387 = vsub.f32 %v328, %v359
        %v388 = vmul.f32 %v384, 1.442695
        %v389 = vpow.pop %v388
        %v390 = vmul.f32 %v385, 1.442695
        %v391 = vpow.pop %v390
        %v392 = vmul.f32 %v386, 1.442695
        %v393 = vpow.pop %v392
        %v394 = vmul.f32 %v387, 1.442695
        %v395 = vpow.pop %v394
        %v396 = vadd.f32 %v372, %v389
        %v397 = vadd.f32 %v373, %v391
        %v398 = vadd.f32 %v374, %v393
        %v399 = vadd.f32 %v375, %v395
        %vm400 = vcmp.eq.s32.totalorder %v316, 1
        %vm401 = vcmp.eq.s32.totalorder %v317, 1
        %vm402 = vcmp.eq.s32.totalorder %v318, 1
        %vm403 = vcmp.eq.s32.totalorder %v319, 1
        %v404 = vsel %vm400, %v325, %v380
        %v405 = vsel %vm401, %v326, %v381
        %v406 = vsel %vm402, %v327, %v382
        %v407 = vsel %vm403, %v328, %v383
        %v408 = vsub.f32 %v334, %v356
        %v409 = vsub.f32 %v335, %v357
        %v410 = vsub.f32 %v336, %v358
        %v411 = vsub.f32 %v337, %v359
        %v412 = vmul.f32 %v408, 1.442695
        %v413 = vpow.pop %v412
        %v414 = vmul.f32 %v409, 1.442695
        %v415 = vpow.pop %v414
        %v416 = vmul.f32 %v410, 1.442695
        %v417 = vpow.pop %v416
        %v418 = vmul.f32 %v411, 1.442695
        %v419 = vpow.pop %v418
        %v420 = vadd.f32 %v396, %v413
        %v421 = vadd.f32 %v397, %v415
        %v422 = vadd.f32 %v398, %v417
        %v423 = vadd.f32 %v399, %v419
        %vm424 = vcmp.eq.s32.totalorder %v316, 2
        %vm425 = vcmp.eq.s32.totalorder %v317, 2
        %vm426 = vcmp.eq.s32.totalorder %v318, 2
        %vm427 = vcmp.eq.s32.totalorder %v319, 2
        %v428 = vsel %vm424, %v334, %v404
        %v429 = vsel %vm425, %v335, %v405
        %v430 = vsel %vm426, %v336, %v406
        %v431 = vsel %vm427, %v337, %v407
        %v432 = vsub.f32 %v343, %v356
        %v433 = vsub.f32 %v344, %v357
        %v434 = vsub.f32 %v345, %v358
        %v435 = vsub.f32 %v346, %v359
        %v436 = vmul.f32 %v432, 1.442695
        %v437 = vpow.pop %v436
        %v438 = vmul.f32 %v433, 1.442695
        %v439 = vpow.pop %v438
        %v440 = vmul.f32 %v434, 1.442695
        %v441 = vpow.pop %v440
        %v442 = vmul.f32 %v435, 1.442695
        %v443 = vpow.pop %v442
        %v444 = vadd.f32 %v420, %v437
        %v445 = vadd.f32 %v421, %v439
        %v446 = vadd.f32 %v422, %v441
        %v447 = vadd.f32 %v423, %v443
        %vm448 = vcmp.eq.s32.totalorder %v316, 3
        %vm449 = vcmp.eq.s32.totalorder %v317, 3
        %vm450 = vcmp.eq.s32.totalorder %v318, 3
        %vm451 = vcmp.eq.s32.totalorder %v319, 3
        %v452 = vsel %vm448, %v343, %v428
        %v453 = vsel %vm449, %v344, %v429
        %v454 = vsel %vm450, %v345, %v430
        %v455 = vsel %vm451, %v346, %v431
        %v456 = vsub.f32 %v352, %v356
        %v457 = vsub.f32 %v353, %v357
        %v458 = vsub.f32 %v354, %v358
        %v459 = vsub.f32 %v355, %v359
        %v460 = vmul.f32 %v456, 1.442695
        %v461 = vpow.pop %v460
        %v462 = vmul.f32 %v457, 1.442695
        %v463 = vpow.pop %v462
        %v464 = vmul.f32 %v458, 1.442695
        %v465 = vpow.pop %v464
        %v466 = vmul.f32 %v459, 1.442695
        %v467 = vpow.pop %v466
        %v468 = vadd.f32 %v444, %v461
        %v469 = vadd.f32 %v445, %v463
        %v470 = vadd.f32 %v446, %v465
        %v471 = vadd.f32 %v447, %v467
        %vm472 = vcmp.eq.s32.totalorder %v316, 4
        %vm473 = vcmp.eq.s32.totalorder %v317, 4
        %vm474 = vcmp.eq.s32.totalorder %v318, 4
        %vm475 = vcmp.eq.s32.totalorder %v319, 4
        %v476 = vsel %vm472, %v352, %v452
        %v477 = vsel %vm473, %v353, %v453
        %v478 = vsel %vm474, %v354, %v454
        %v479 = vsel %vm475, %v355, %v455
        %v480 = vlog2.pop %v468
        %v481 = vmul.f32 %v480, 0.6931472
        %v482 = vlog2.pop %v469
        %v483 = vmul.f32 %v482, 0.6931472
        %v484 = vlog2.pop %v470
        %v485 = vmul.f32 %v484, 0.6931472
        %v486 = vlog2.pop %v471
        %v487 = vmul.f32 %v486, 0.6931472
        %v488 = vadd.f32 %v356, %v481
        %v489 = vadd.f32 %v357, %v483
        %v490 = vadd.f32 %v358, %v485
        %v491 = vadd.f32 %v359, %v487
        %v492 = vsub.f32 %v488, %v476
        %v493 = vsub.f32 %v489, %v477
        %v494 = vsub.f32 %v490, %v478
        %v495 = vsub.f32 %v491, %v479
        %v496 = vld [vmem:[#allocation2] sm:$0xff]
        %v497 = vld [vmem:[#allocation2 + $0x8] sm:$0xff]
        %v498 = vld [vmem:[#allocation2 + $0x10] sm:$0xff]
        %v499 = vld [vmem:[#allocation2 + $0x18] sm:$0xff]
        %v500 = vmul.f32 %v312, %v492
        %v501 = vmul.f32 %v313, %v493
        %v502 = vmul.f32 %v314, %v494
        %v503 = vmul.f32 %v315, %v495
        %504 = vadd.xlane.f32.xlu0 %v500
        %v505 = vpop.xlane.xlu0 %504
        %506 = vadd.xlane.f32.xlu0 %v501
        %v507 = vpop.xlane.xlu0 %506
        %508 = vadd.xlane.f32.xlu0 %v502
        %v509 = vpop.xlane.xlu0 %508
        %510 = vadd.xlane.f32.xlu0 %v503
        %v511 = vpop.xlane.xlu0 %510
        %v512 = vadd.f32 %v496, %v505
        %v513 = vadd.f32 %v497, %v507
        %v514 = vadd.f32 %v498, %v509
        %v515 = vadd.f32 %v499, %v511
        %vm516 = vcmask 7168
        %517 = vst.msk [vmem:[#allocation2] sm:$0xff] %vm516, %v512
        %518 = vst.msk [vmem:[#allocation2 + $0x8] sm:$0xff] %vm516, %v513
        %519 = vst.msk [vmem:[#allocation2 + $0x10] sm:$0xff] %vm516, %v514
        %520 = vst.msk [vmem:[#allocation2 + $0x18] sm:$0xff] %vm516, %v515
        %v521 = vld [vmem:[#allocation3] sm:$0xff]
        %v522 = vld [vmem:[#allocation3 + $0x8] sm:$0xff]
        %v523 = vld [vmem:[#allocation3 + $0x10] sm:$0xff]
        %v524 = vld [vmem:[#allocation3 + $0x18] sm:$0xff]
        %525 = vadd.xlane.f32.xlu0 %v312
        %v526 = vpop.xlane.xlu0 %525
        %527 = vadd.xlane.f32.xlu0 %v313
        %v528 = vpop.xlane.xlu0 %527
        %529 = vadd.xlane.f32.xlu0 %v314
        %v530 = vpop.xlane.xlu0 %529
        %531 = vadd.xlane.f32.xlu0 %v315
        %v532 = vpop.xlane.xlu0 %531
        %v533 = vadd.f32 %v521, %v526
        %v534 = vadd.f32 %v522, %v528
        %v535 = vadd.f32 %v523, %v530
        %v536 = vadd.f32 %v524, %v532
        %537 = vst.msk [vmem:[#allocation3] sm:$0xff] %vm516, %v533
        %538 = vst.msk [vmem:[#allocation3 + $0x8] sm:$0xff] %vm516, %v534
        %539 = vst.msk [vmem:[#allocation3 + $0x10] sm:$0xff] %vm516, %v535
        %540 = vst.msk [vmem:[#allocation3 + $0x18] sm:$0xff] %vm516, %v536
        %p541 = scmp.eq.s32.totalorder %s23, 1
        // Predicated region
        $region57: #{tpu_custom_call.1} parent=35 // pred_check
          %p542 = pneg %p541
        $region58: #{tpu_custom_call.1} parent=35 // pred_check_branch
          %544 = sbr.rel (%p542) target = $region60
        $region59: #{tpu_custom_call.1} parent=35 // pred_region
          %v545 = vld [vmem:[#allocation2] sm:$0xff]
          %v546 = vsel %vm516, %v545, 0.0
          %547 = vadd.xlane.f32.xlu0 %v546
          %v548 = vpop.xlane.xlu0 %547
          %v549 = vrot.slane %v548, 4
          %v550 = vadd.f32 %v548, %v549
          %v551 = vrot.slane %v550, 2
          %v552 = vadd.f32 %v550, %v551
          %v553 = vrot.slane %v552, 1
          %v554 = vadd.f32 %v552, %v553
          %s555 = vtos %v554
          %v556 = vld [vmem:[#allocation3] sm:$0xff]
          %v557 = vsel %vm516, %v556, 0.0
          %558 = vadd.xlane.f32.xlu0 %v557
          %v559 = vpop.xlane.xlu0 %558
          %v560 = vrot.slane %v559, 4
          %v561 = vadd.f32 %v559, %v560
          %v562 = vrot.slane %v561, 2
          %v563 = vadd.f32 %v561, %v562
          %v564 = vrot.slane %v563, 1
          %v565 = vadd.f32 %v563, %v564
          %s566 = vtos %v565
          %v567 = vstv %s566
          %v568 = vrcp.pop %v567
          %v569 = vmul.f32 %v567, %v568
          %v570 = vsub.f32 1.0, %v569
          %v571 = vmul.f32 %v568, %v570
          %v572 = vadd.f32 %v568, %v571
          %vm573 = vweird.f32 %v567
          %vm574 = vweird.f32 %v568
          %vm575 = vmor %vm573, %vm574
          %v576 = vsel %vm575, %v568, %v572
          %v577 = vand.u32 2147483647, %v567
          %vm578 = vcmp.eq.f32.partialorder %v577, 8.507059e+37
          %v579 = vand.u32 %v567, 2147483648
          %v580 = vor.u32 1.1754944e-38, %v579
          %v581 = vsel %vm578, %v580, %v576
          %s582 = vtos %v581
          %s583 = smul.f32 %s555, %s582
          %s584 = sadd.f32 %s583, 0.0
          %v585 = vld [vmem:[#allocation2 + $0x8] sm:$0xff]
          %v586 = vsel %vm516, %v585, 0.0
          %587 = vadd.xlane.f32.xlu0 %v586
          %v588 = vpop.xlane.xlu0 %587
          %v589 = vrot.slane %v588, 4
          %v590 = vadd.f32 %v588, %v589
          %v591 = vrot.slane %v590, 2
          %v592 = vadd.f32 %v590, %v591
          %v593 = vrot.slane %v592, 1
          %v594 = vadd.f32 %v592, %v593
          %s595 = vtos %v594
          %v596 = vld [vmem:[#allocation3 + $0x8] sm:$0xff]
          %v597 = vsel %vm516, %v596, 0.0
          %598 = vadd.xlane.f32.xlu0 %v597
          %v599 = vpop.xlane.xlu0 %598
          %v600 = vrot.slane %v599, 4
          %v601 = vadd.f32 %v599, %v600
          %v602 = vrot.slane %v601, 2
          %v603 = vadd.f32 %v601, %v602
          %v604 = vrot.slane %v603, 1
          %v605 = vadd.f32 %v603, %v604
          %s606 = vtos %v605
          %v607 = vstv %s606
          %v608 = vrcp.pop %v607
          %v609 = vmul.f32 %v607, %v608
          %v610 = vsub.f32 1.0, %v609
          %v611 = vmul.f32 %v608, %v610
          %v612 = vadd.f32 %v608, %v611
          %vm613 = vweird.f32 %v607
          %vm614 = vweird.f32 %v608
          %vm615 = vmor %vm613, %vm614
          %v616 = vsel %vm615, %v608, %v612
          %v617 = vand.u32 2147483647, %v607
          %vm618 = vcmp.eq.f32.partialorder %v617, 8.507059e+37
          %v619 = vand.u32 %v607, 2147483648
          %v620 = vor.u32 1.1754944e-38, %v619
          %v621 = vsel %vm618, %v620, %v616
          %s622 = vtos %v621
          %s623 = smul.f32 %s595, %s622
          %s624 = sadd.f32 %s584, %s623
          %v625 = vld [vmem:[#allocation2 + $0x10] sm:$0xff]
          %v626 = vsel %vm516, %v625, 0.0
          %627 = vadd.xlane.f32.xlu0 %v626
          %v628 = vpop.xlane.xlu0 %627
          %v629 = vrot.slane %v628, 4
          %v630 = vadd.f32 %v628, %v629
          %v631 = vrot.slane %v630, 2
          %v632 = vadd.f32 %v630, %v631
          %v633 = vrot.slane %v632, 1
          %v634 = vadd.f32 %v632, %v633
          %s635 = vtos %v634
          %v636 = vld [vmem:[#allocation3 + $0x10] sm:$0xff]
          %v637 = vsel %vm516, %v636, 0.0
          %638 = vadd.xlane.f32.xlu0 %v637
          %v639 = vpop.xlane.xlu0 %638
          %v640 = vrot.slane %v639, 4
          %v641 = vadd.f32 %v639, %v640
          %v642 = vrot.slane %v641, 2
          %v643 = vadd.f32 %v641, %v642
          %v644 = vrot.slane %v643, 1
          %v645 = vadd.f32 %v643, %v644
          %s646 = vtos %v645
          %v647 = vstv %s646
          %v648 = vrcp.pop %v647
          %v649 = vmul.f32 %v647, %v648
          %v650 = vsub.f32 1.0, %v649
          %v651 = vmul.f32 %v648, %v650
          %v652 = vadd.f32 %v648, %v651
          %vm653 = vweird.f32 %v647
          %vm654 = vweird.f32 %v648
          %vm655 = vmor %vm653, %vm654
          %v656 = vsel %vm655, %v648, %v652
          %v657 = vand.u32 2147483647, %v647
          %vm658 = vcmp.eq.f32.partialorder %v657, 8.507059e+37
          %v659 = vand.u32 %v647, 2147483648
          %v660 = vor.u32 1.1754944e-38, %v659
          %v661 = vsel %vm658, %v660, %v656
          %s662 = vtos %v661
          %s663 = smul.f32 %s635, %s662
          %s664 = sadd.f32 %s624, %s663
          %v665 = vld [vmem:[#allocation2 + $0x18] sm:$0xff]
          %v666 = vsel %vm516, %v665, 0.0
          %667 = vadd.xlane.f32.xlu0 %v666
          %v668 = vpop.xlane.xlu0 %667
          %v669 = vrot.slane %v668, 4
          %v670 = vadd.f32 %v668, %v669
          %v671 = vrot.slane %v670, 2
          %v672 = vadd.f32 %v670, %v671
          %v673 = vrot.slane %v672, 1
          %v674 = vadd.f32 %v672, %v673
          %s675 = vtos %v674
          %v676 = vld [vmem:[#allocation3 + $0x18] sm:$0xff]
          %v677 = vsel %vm516, %v676, 0.0
          %678 = vadd.xlane.f32.xlu0 %v677
          %v679 = vpop.xlane.xlu0 %678
          %v680 = vrot.slane %v679, 4
          %v681 = vadd.f32 %v679, %v680
          %v682 = vrot.slane %v681, 2
          %v683 = vadd.f32 %v681, %v682
          %v684 = vrot.slane %v683, 1
          %v685 = vadd.f32 %v683, %v684
          %s686 = vtos %v685
          %v687 = vstv %s686
          %v688 = vrcp.pop %v687
          %v689 = vmul.f32 %v687, %v688
          %v690 = vsub.f32 1.0, %v689
          %v691 = vmul.f32 %v688, %v690
          %v692 = vadd.f32 %v688, %v691
          %vm693 = vweird.f32 %v687
          %vm694 = vweird.f32 %v688
          %vm695 = vmor %vm693, %vm694
          %v696 = vsel %vm695, %v688, %v692
          %v697 = vand.u32 2147483647, %v687
          %vm698 = vcmp.eq.f32.partialorder %v697, 8.507059e+37
          %v699 = vand.u32 %v687, 2147483648
          %v700 = vor.u32 1.1754944e-38, %v699
          %v701 = vsel %vm698, %v700, %v696
          %s702 = vtos %v701
          %s703 = smul.f32 %s675, %s702
          %s704 = sadd.f32 %s664, %s703
          %v705 = vld [vmem:[#allocation10] sm:$0xff]
          %v706 = vmul.f32 %v705, %v705
          %707 = vadd.xlane.f32.xlu0 %v706
          %v708 = vpop.xlane.xlu0 %707
          %v709 = vrot.slane %v708, 4
          %v710 = vadd.f32 %v708, %v709
          %v711 = vrot.slane %v710, 2
          %v712 = vadd.f32 %v710, %v711
          %v713 = vrot.slane %v712, 1
          %v714 = vadd.f32 %v712, %v713
          %s715 = vtos %v714
          %s716 = smul.f32 %s715, 0.0078125
          %s717 = smul.f32 %s704, 0.25
          %s718 = sadd.f32 %s717, %s716
          %s719 = smul.f32 %s718, 0.5
          %v720 = vstv %s719
          %vm721 = vcmask 0
          %722 = vst.msk [vmem:[#allocation12] sm:$0x1] %vm721, %v720
        $region60: #{tpu_custom_call.1} parent=35 // pred_fallthru
          _
        // Predicated region
        $region61: #{tpu_custom_call.1} parent=35 // pred_check
          %p723 = pneg %p135
        $region62: #{tpu_custom_call.1} parent=35 // pred_check_branch
          %725 = sbr.rel (%p723) target = $region64
        $region63: #{tpu_custom_call.1} parent=35 // pred_region
          %727 = vsyncadd [#allocation6], 0
          %s729 = sshll.u32 [#allocation12], 4
          %s730 = int_to_ptr.vmem [resolvable:$true] %s729
          %s731 = sshll.u32 %s4, 4
          %s732 = int_to_ptr.hbm [resolvable:$true] %s731
          %734 = dma.vmem_to_hbm [thread:$0]  %s730, 16, %s732, [#allocation6]
        $region64: #{tpu_custom_call.1} parent=35 // pred_fallthru
          _
        // Predicated region
        $region65: #{tpu_custom_call.1} parent=35 // pred_check
          %p735 = pneg %p135
        $region66: #{tpu_custom_call.1} parent=35 // pred_check_branch
          %737 = sbr.rel (%p735) target = $region68
        $region67: #{tpu_custom_call.1} parent=35 // pred_region
          %739 = dma.done [#allocation6], 16
        $region68: #{tpu_custom_call.1} parent=35 // pred_fallthru
          _
      $region36: #{tpu_custom_call.1} parent=5 // pred_fallthru
        _
      %p740 = scmp.le.s32.totalorder 2, %s18
      // Predicated region
      $region69: #{tpu_custom_call.1} parent=5 // pred_check
        %p741 = pneg %p740
      $region70: #{tpu_custom_call.1} parent=5 // pred_check_branch
        %743 = sbr.rel (%p741) target = $region72
      $region71: #{tpu_custom_call.1} parent=5 // pred_region
        %s744 = ssub.s32 %s18, 2
      $region72: #{tpu_custom_call.1} parent=5 // pred_fallthru
        _
    $region6: #{tpu_custom_call.1} parent=1 // loop_footer
      %s22 = sadd.s32 1, %s18
    $region7: #{tpu_custom_call.1} parent=1 // loop_footer_branch
      %17 = sbr.rel target = $region3
    $region8: #{tpu_custom_call.1} parent=1 // loop_exit
      _
    %745 = vsyncpa [#allocation5], 1
    %s746 = scalar_lea.sflag [#allocation5], 1
    %747 = vsyncpa %s746, 1
    %748 = vsyncpa [#allocation8], 1
    %s749 = scalar_lea.sflag [#allocation8], 1
    %750 = vsyncpa %s749, 1
    %751 = vsyncpa [#allocation11], 1
    %752 = vsyncpa [#allocation6], 1
    %s753 = scalar_lea.sflag [#allocation6], 1
    %754 = vsyncpa %s753, 1

</llo_original>
